<compile_context>
chip_gen: v7x
topology: tpu7x:2x2x1
jax: 0.10.0
libtpu: 0.0.40
codegen_flags: <defaults>
</compile_context>

<pallas_src>
import numpy as np
import jax
import jax.numpy as jnp
from jax.experimental import pallas as pl
from jax.experimental.pallas import tpu as pltpu

# ---- synthetic "model_cfg" constants (typical PointPillars-style anchor head) ----
NUM_CLASS = 3
NUM_DIR_BINS = 2
DIR_OFFSET = 0.78539          # model_cfg.DIR_OFFSET (standard OpenPCDet/opencood value)
DIR_LIMIT_OFFSET = 0.0        # model_cfg.DIR_LIMIT_OFFSET
CODE_SIZE = 7                 # ResidualCoder code size
ANCHOR_SIZES = [[3.9, 1.6, 1.56]]
ANCHOR_ROTATIONS = [0.0, np.pi / 2.0]
ANCHOR_Z_CENTER = -1.0
POINT_CLOUD_RANGE = [0.0, -8.0, -3.0, 16.0, 8.0, 1.0]
NUM_ANCHORS_PER_LOC = len(ANCHOR_SIZES) * len(ANCHOR_ROTATIONS)   # 2

_PERIOD = 2.0 * np.pi / NUM_DIR_BINS


# ------------------------------- Pallas kernel ------------------------------------
def _decode_kernel(box_ref, anc_ref, dir_ref, out_ref):
    """Box decode + direction correction for one (anchor-tile, batch) block.

    box_ref: (1, 7, S, 128)   residual predictions
    anc_ref: (1, 7, S, 128)   anchors (batch-invariant)
    dir_ref: (1, D, S, 128)   D == 1 -> precomputed (dir1 - dir0); D >= 2 -> raw logits
    out_ref: (1, 7, S, 128)   decoded boxes
    Every per-channel slice is a dense [S, 128] slab (full vregs, lane-dense stores).
    """
    xa = anc_ref[0, 0, :, :]
    ya = anc_ref[0, 1, :, :]
    za = anc_ref[0, 2, :, :]
    dxa = anc_ref[0, 3, :, :]
    dya = anc_ref[0, 4, :, :]
    dza = anc_ref[0, 5, :, :]
    ra = anc_ref[0, 6, :, :]
    # sqrt runs on the otherwise-idle EUP; cheaper than DMA-ing a precomputed channel.
    diag = jnp.sqrt(dxa * dxa + dya * dya)

    f32 = jnp.float32
    # ResidualCoder.decode_torch — store each channel directly (lane-dense vst).
    out_ref[0, 0, :, :] = box_ref[0, 0, :, :].astype(f32) * diag + xa
    out_ref[0, 1, :, :] = box_ref[0, 1, :, :].astype(f32) * diag + ya
    out_ref[0, 2, :, :] = box_ref[0, 2, :, :].astype(f32) * dza + za
    out_ref[0, 3, :, :] = jnp.exp(box_ref[0, 3, :, :].astype(f32)) * dxa
    out_ref[0, 4, :, :] = jnp.exp(box_ref[0, 4, :, :].astype(f32)) * dya
    out_ref[0, 5, :, :] = jnp.exp(box_ref[0, 5, :, :].astype(f32)) * dza

    rg = box_ref[0, 6, :, :].astype(f32) + ra

    d = dir_ref.shape[1]   # static at trace time
    if d == 1:
        # torch-layout path: wrapper fused (dir1 - dir0) into its relayout,
        # strict > matches first-max-wins argmax for ties.
        lbl = (dir_ref[0, 0, :, :].astype(f32) > 0.0).astype(f32)
    else:
        best = dir_ref[0, 0, :, :].astype(f32)
        lbl = jnp.zeros_like(best)
        for k in range(1, d):
            cur = dir_ref[0, k, :, :].astype(f32)
            take = cur > best
            best = jnp.where(take, cur, best)
            lbl = jnp.where(take, jnp.full_like(best, float(k)), lbl)

    # dir_rot = limit_period(rg - dir_offset, dir_limit_offset, 2*pi/num_bins)
    # Division form for bit parity with opencood/torch.
    val = rg - DIR_OFFSET
    dir_rot = val - jnp.floor(val / _PERIOD + DIR_LIMIT_OFFSET) * _PERIOD
    out_ref[0, 6, :, :] = dir_rot + DIR_OFFSET + _PERIOD * lbl


# ------------------------------- tiling helpers ------------------------------------
def _round_up(x, m):
    return (x + m - 1) // m * m


def _tiling(n_anchors, target_anchor_tile):
    """Pick (S, NP_pad, n_tiles): each grid step covers S sublane-rows of 128 anchors.

    * Tiny grids: a single block rounded up to a multiple of 8 sublanes (full vregs).
    * Large grids: blocks of up to `target_anchor_tile` anchors, but always >= 2
      anchor tiles so both v7x TensorCores get work (axis 0 is "parallel")."""
    np_rows = pl.cdiv(n_anchors, 128)                     # number of 128-anchor rows
    s_target = max(8, _round_up(target_anchor_tile // 128, 8))
    if np_rows <= 16:                                     # tiny problem: one block
        s = _round_up(np_rows, 8)
        return s, s, 1
    s = min(s_target, _round_up(pl.cdiv(np_rows, 2), 8))  # keep >= 2 tiles
    n_tiles = pl.cdiv(np_rows, s)
    return s, n_tiles * s, n_tiles


def _blockify_last(x, n, np_pad):
    """(..., n) -> (..., np_pad, 128): pad the tail (if needed) and reshape (free)."""
    pad = np_pad * 128 - n
    if pad:
        x = jnp.pad(x, ((0, 0),) * (x.ndim - 1) + ((0, pad),))
    return x.reshape(*x.shape[:-1], np_pad, 128)


# ------------------------------- pallas_call driver --------------------------------
def _run_decode(box_t, anc_t, dir_t, *, S, n_tiles):
    """box_t (B,7,NP,128), anc_t (1,7,NP,128), dir_t (B,D,NP,128) -> (B,7,NP,128)."""
    B, _, NP_pad, _ = box_t.shape
    D = dir_t.shape[1]
    n_elem = NP_pad * 128

    cost = pl.CostEstimate(
        flops=int(30 * B * n_elem),
        transcendentals=int(4 * B * n_elem),              # 3 exp + 1 sqrt per anchor
        bytes_accessed=int(4 * n_elem * (B * (CODE_SIZE + D + CODE_SIZE) + CODE_SIZE)),
    )

    return pl.pallas_call(
        _decode_kernel,
        out_shape=jax.ShapeDtypeStruct((B, CODE_SIZE, NP_pad, 128), jnp.float32),
        grid_spec=pltpu.PrefetchScalarGridSpec(
            num_scalar_prefetch=0,
            # anchor-tile outer, batch inner: the anchor block index is constant
            # across the inner batch loop so its DMA is issued once per tile.
            grid=(n_tiles, B),
            in_specs=[
                pl.BlockSpec((1, CODE_SIZE, S, 128), lambda i, b: (b, 0, i, 0)),
                pl.BlockSpec((1, CODE_SIZE, S, 128), lambda i, b: (0, 0, i, 0)),
                pl.BlockSpec((1, D, S, 128), lambda i, b: (b, 0, i, 0)),
            ],
            out_specs=pl.BlockSpec((1, CODE_SIZE, S, 128), lambda i, b: (b, 0, i, 0)),
        ),
        compiler_params=pltpu.CompilerParams(
            dimension_semantics=("parallel", "parallel"),
            # large tiles double-buffered stay well under 32 MiB; needed on v5e whose
            # default scoped VMEM is only 16 MiB.
            vmem_limit_bytes=32 << 20),
        cost_estimate=cost,
    )(box_t, anc_t, dir_t)


# ------------------------- primary (relayout-free) entry point ---------------------
def decode_boxes_channel_major(box_cm, dir_cm, anchors_cm, *, anchor_tile=65536):
    """Fast path: head outputs are already channel-planar, so no relayout is done.

    box_cm:     (B, 7, N)             box residuals, channel-planar
    dir_cm:     (B, NUM_DIR_BINS, N)  direction logits, channel-planar
    anchors_cm: (7, N)                anchors, channel-planar
    Returns decoded boxes, channel-planar: (B, 7, N).
    """
    B, C, N = box_cm.shape
    assert C == CODE_SIZE
    S, NP_pad, n_tiles = _tiling(N, anchor_tile)

    box_t = _blockify_last(box_cm.astype(jnp.float32), N, NP_pad)
    dir_t = _blockify_last(dir_cm.astype(jnp.float32), N, NP_pad)
    anc_t = _blockify_last(anchors_cm.astype(jnp.float32)[None], N, NP_pad)

    out = _run_decode(box_t, anc_t, dir_t, S=S, n_tiles=n_tiles)
    return out.reshape(B, CODE_SIZE, NP_pad * 128)[:, :, :N]


# ----------------------- torch-layout compatibility wrapper ------------------------
def generate_predicted_boxes(cls_preds, box_preds, dir_cls_preds, anchors, *,
                             anchor_tile=65536):
    """JAX/Pallas equivalent of AnchorHeadTemplate.generate_predicted_boxes.

    cls_preds:     (B, H, W, A*num_class)
    box_preds:     (B, H, W, A*7)
    dir_cls_preds: (B, H, W, A*NUM_DIR_BINS)
    anchors:       (H, W, A, 7)
    Returns: batch_cls_preds (B, N, num_class), batch_box_preds (B, N, 7), N = H*W*A.

    NOTE: this wrapper keeps the torch (B, N, 7) layout contract and therefore still
    performs (B,N,7)<->(B,7,N) relayouts around the kernel.  In deployment prefer
    channel-planar head outputs + `decode_boxes_channel_major` (zero relayout).
    """
    B, H, W, _ = box_preds.shape
    A = anchors.shape[-2]
    N = H * W * A

    batch_cls_preds = cls_preds.reshape(B, N, -1).astype(jnp.float32)

    S, NP_pad, n_tiles = _tiling(N, anchor_tile)

    box_t = _blockify_last(
        box_preds.reshape(B, N, CODE_SIZE).astype(jnp.float32).transpose(0, 2, 1),
        N, NP_pad)

    dirp = dir_cls_preds.reshape(B, N, NUM_DIR_BINS).astype(jnp.float32)
    if NUM_DIR_BINS == 2:
        # Fuse the argmax reduction into the relayout XLA already does:
        # only ONE dir channel is DMA'd; kernel thresholds against 0.
        dir_cm = (dirp[..., 1] - dirp[..., 0])[:, None, :]          # (B, 1, N)
    else:
        dir_cm = dirp.transpose(0, 2, 1)                            # (B, D, N)
    dir_t = _blockify_last(dir_cm, N, NP_pad)

    anc_cm = anchors.reshape(N, CODE_SIZE).astype(jnp.float32).T    # (7, N)
    anc_t = _blockify_last(anc_cm[None], N, NP_pad)

    out = _run_decode(box_t, anc_t, dir_t, S=S, n_tiles=n_tiles)
    batch_box_preds = (out.reshape(B, CODE_SIZE, NP_pad * 128)[:, :, :N]
                       .transpose(0, 2, 1))                         # (B, N, 7)
    return batch_cls_preds, batch_box_preds


# ------------------------- deterministic anchor generation -------------------------
def make_anchors(H, W):
    """Mimics AnchorGenerator: dense anchor grid over the point-cloud range.
    Returns (H, W, A, 7) with A = num_sizes * num_rotations."""
    x0, y0, _, x1, y1, _ = POINT_CLOUD_RANGE
    xs = (np.arange(W, dtype=np.float32) + 0.5) / W * (x1 - x0) + x0
    ys = (np.arange(H, dtype=np.float32) + 0.5) / H * (y1 - y0) + y0
    yy, xx = np.meshgrid(ys, xs, indexing="ij")                       # (H, W)
    anchors = np.zeros((H, W, NUM_ANCHORS_PER_LOC, CODE_SIZE), np.float32)
    a = 0
    for size in ANCHOR_SIZES:
        for rot in ANCHOR_ROTATIONS:
            anchors[:, :, a, 0] = xx
            anchors[:, :, a, 1] = yy
            anchors[:, :, a, 2] = ANCHOR_Z_CENTER
            anchors[:, :, a, 3] = size[0]
            anchors[:, :, a, 4] = size[1]
            anchors[:, :, a, 5] = size[2]
            anchors[:, :, a, 6] = rot
            a += 1
    return jnp.asarray(anchors)


# ------------------------------- pure-JAX reference ---------------------------------
def _reference(cls_preds, box_preds, dir_cls_preds, anchors):
    B, H, W, _ = box_preds.shape
    A = anchors.shape[-2]
    N = H * W * A
    anc = anchors.reshape(1, N, CODE_SIZE)
    t = box_preds.reshape(B, N, CODE_SIZE)
    xa, ya, za, dxa, dya, dza, ra = [anc[..., i] for i in range(7)]
    xt, yt, zt, dxt, dyt, dzt, rt = [t[..., i] for i in range(7)]
    diag = jnp.sqrt(dxa ** 2 + dya ** 2)
    xg, yg, zg = xt * diag + xa, yt * diag + ya, zt * dza + za
    dxg, dyg, dzg = jnp.exp(dxt) * dxa, jnp.exp(dyt) * dya, jnp.exp(dzt) * dza
    rg = rt + ra
    dirp = dir_cls_preds.reshape(B, N, NUM_DIR_BINS)
    dir_labels = jnp.argmax(dirp, axis=-1).astype(jnp.float32)
    period = 2.0 * np.pi / NUM_DIR_BINS
    val = rg - DIR_OFFSET
    dir_rot = val - jnp.floor(val / period + DIR_LIMIT_OFFSET) * period
    rg = dir_rot + DIR_OFFSET + period * dir_labels
    boxes = jnp.stack([xg, yg, zg, dxg, dyg, dzg, rg], axis=-1)
    return cls_preds.reshape(B, N, -1).astype(jnp.float32), boxes


if __name__ == "__main__":
    # case 1: N multiple of 128 (no tail padding); case 2: ragged N exercising padding
    for (B, H, W) in [(2, 16, 16), (2, 10, 6)]:
        A = NUM_ANCHORS_PER_LOC
        N = H * W * A
        key = jax.random.PRNGKey(0)
        k1, k2, k3 = jax.random.split(key, 3)
        cls_preds = jax.random.normal(k1, (B, H, W, A * NUM_CLASS), jnp.float32)
        box_preds = 0.1 * jax.random.normal(k2, (B, H, W, A * CODE_SIZE), jnp.float32)
        dir_cls_preds = jax.random.normal(k3, (B, H, W, A * NUM_DIR_BINS), jnp.float32)
        anchors = make_anchors(H, W)

        ref_cls, ref_box = _reference(cls_preds, box_preds, dir_cls_preds, anchors)

        # --- torch-layout compatibility path (relayouts in wrapper) ---
        batch_cls, batch_box = generate_predicted_boxes(
            cls_preds, box_preds, dir_cls_preds, anchors)
        jax.block_until_ready(batch_box)
        np.testing.assert_allclose(np.asarray(batch_cls), np.asarray(ref_cls),
                                   rtol=1e-5, atol=1e-5)
        np.testing.assert_allclose(np.asarray(batch_box), np.asarray(ref_box),
                                   rtol=1e-5, atol=1e-5)
        assert batch_cls.shape == (B, N, NUM_CLASS)
        assert batch_box.shape == (B, N, CODE_SIZE)

        # --- channel-planar fast path (zero relayout around the kernel) ---
        box_cm = box_preds.reshape(B, N, CODE_SIZE).transpose(0, 2, 1)
        dir_cm = dir_cls_preds.reshape(B, N, NUM_DIR_BINS).transpose(0, 2, 1)
        anc_cm = anchors.reshape(N, CODE_SIZE).T
        out_cm = decode_boxes_channel_major(box_cm, dir_cm, anc_cm)
        jax.block_until_ready(out_cm)
        np.testing.assert_allclose(np.asarray(out_cm.transpose(0, 2, 1)),
                                   np.asarray(ref_box), rtol=1e-5, atol=1e-5)
        assert out_cm.shape == (B, CODE_SIZE, N)

    print("KERNEL_OK")
</pallas_src>

<mosaic_0001>
module attributes {stable_mosaic.version = 11 : i64} {
  func.func @_decode_kernel(%arg0: i32, %arg1: i32, %arg2: memref<1x7x8x128xf32, #tpu.memory_space<vmem>>, %arg3: memref<1x7x8x128xf32, #tpu.memory_space<vmem>>, %arg4: memref<1x1x8x128xf32, #tpu.memory_space<vmem>>, %arg5: memref<1x7x8x128xf32, #tpu.memory_space<vmem>>) attributes {dimension_semantics = [#tpu.dimension_semantics<parallel>, #tpu.dimension_semantics<parallel>], iteration_bounds = array<i64: 1, 2>, scalar_prefetch = 0 : i64, scratch_operands = 0 : i64, tpu.core_type = #tpu.core_type<tc>, window_params = [{transform_indices = @transform_0, window_bounds = array<i64: 1, 7, 8, 128>}, {transform_indices = @transform_1, window_bounds = array<i64: 1, 7, 8, 128>}, {transform_indices = @transform_2, window_bounds = array<i64: 1, 1, 8, 128>}, {transform_indices = @transform_3, window_bounds = array<i64: 1, 7, 8, 128>}]} {
    %c0 = arith.constant 0 : index
    %c0_0 = arith.constant 0 : index
    %c0_1 = arith.constant 0 : index
    %c0_2 = arith.constant 0 : index
    %0 = vector.load %arg3[%c0, %c0_0, %c0_1, %c0_2] : memref<1x7x8x128xf32, #tpu.memory_space<vmem>>, vector<1x1x8x128xf32>
    %1 = vector.shape_cast %0 : vector<1x1x8x128xf32> to vector<8x128xf32>
    %c0_3 = arith.constant 0 : index
    %c1 = arith.constant 1 : index
    %c0_4 = arith.constant 0 : index
    %c0_5 = arith.constant 0 : index
    %2 = vector.load %arg3[%c0_3, %c1, %c0_4, %c0_5] : memref<1x7x8x128xf32, #tpu.memory_space<vmem>>, vector<1x1x8x128xf32>
    %3 = vector.shape_cast %2 : vector<1x1x8x128xf32> to vector<8x128xf32>
    %c0_6 = arith.constant 0 : index
    %c2 = arith.constant 2 : index
    %c0_7 = arith.constant 0 : index
    %c0_8 = arith.constant 0 : index
    %4 = vector.load %arg3[%c0_6, %c2, %c0_7, %c0_8] : memref<1x7x8x128xf32, #tpu.memory_space<vmem>>, vector<1x1x8x128xf32>
    %5 = vector.shape_cast %4 : vector<1x1x8x128xf32> to vector<8x128xf32>
    %c0_9 = arith.constant 0 : index
    %c3 = arith.constant 3 : index
    %c0_10 = arith.constant 0 : index
    %c0_11 = arith.constant 0 : index
    %6 = vector.load %arg3[%c0_9, %c3, %c0_10, %c0_11] : memref<1x7x8x128xf32, #tpu.memory_space<vmem>>, vector<1x1x8x128xf32>
    %7 = vector.shape_cast %6 : vector<1x1x8x128xf32> to vector<8x128xf32>
    %c0_12 = arith.constant 0 : index
    %c4 = arith.constant 4 : index
    %c0_13 = arith.constant 0 : index
    %c0_14 = arith.constant 0 : index
    %8 = vector.load %arg3[%c0_12, %c4, %c0_13, %c0_14] : memref<1x7x8x128xf32, #tpu.memory_space<vmem>>, vector<1x1x8x128xf32>
    %9 = vector.shape_cast %8 : vector<1x1x8x128xf32> to vector<8x128xf32>
    %c0_15 = arith.constant 0 : index
    %c5 = arith.constant 5 : index
    %c0_16 = arith.constant 0 : index
    %c0_17 = arith.constant 0 : index
    %10 = vector.load %arg3[%c0_15, %c5, %c0_16, %c0_17] : memref<1x7x8x128xf32, #tpu.memory_space<vmem>>, vector<1x1x8x128xf32>
    %11 = vector.shape_cast %10 : vector<1x1x8x128xf32> to vector<8x128xf32>
    %c0_18 = arith.constant 0 : index
    %c6 = arith.constant 6 : index
    %c0_19 = arith.constant 0 : index
    %c0_20 = arith.constant 0 : index
    %12 = vector.load %arg3[%c0_18, %c6, %c0_19, %c0_20] : memref<1x7x8x128xf32, #tpu.memory_space<vmem>>, vector<1x1x8x128xf32>
    %13 = vector.shape_cast %12 : vector<1x1x8x128xf32> to vector<8x128xf32>
    %14 = arith.mulf %7, %7 : vector<8x128xf32>
    %15 = arith.mulf %9, %9 : vector<8x128xf32>
    %16 = arith.addf %14, %15 : vector<8x128xf32>
    %17 = math.sqrt %16 : vector<8x128xf32>
    %c0_21 = arith.constant 0 : index
    %c0_22 = arith.constant 0 : index
    %c0_23 = arith.constant 0 : index
    %c0_24 = arith.constant 0 : index
    %18 = vector.load %arg2[%c0_21, %c0_22, %c0_23, %c0_24] : memref<1x7x8x128xf32, #tpu.memory_space<vmem>>, vector<1x1x8x128xf32>
    %19 = vector.shape_cast %18 : vector<1x1x8x128xf32> to vector<8x128xf32>
    %20 = arith.mulf %19, %17 : vector<8x128xf32>
    %21 = arith.addf %20, %1 : vector<8x128xf32>
    %c0_25 = arith.constant 0 : index
    %c0_26 = arith.constant 0 : index
    %c0_27 = arith.constant 0 : index
    %c0_28 = arith.constant 0 : index
    %22 = vector.load %arg5[%c0_25, %c0_26, %c0_27, %c0_28] : memref<1x7x8x128xf32, #tpu.memory_space<vmem>>, vector<1x1x8x128xf32>
    %23 = vector.shape_cast %22 : vector<1x1x8x128xf32> to vector<8x128xf32>
    %24 = vector.shape_cast %21 : vector<8x128xf32> to vector<1x1x8x128xf32>
    tpu.vector_store %arg5[%c0_25, %c0_26, %c0_27, %c0_28], %24 {strides = array<i32>} : memref<1x7x8x128xf32, #tpu.memory_space<vmem>>, vector<1x1x8x128xf32>,
    %c0_29 = arith.constant 0 : index
    %c1_30 = arith.constant 1 : index
    %c0_31 = arith.constant 0 : index
    %c0_32 = arith.constant 0 : index
    %25 = vector.load %arg2[%c0_29, %c1_30, %c0_31, %c0_32] : memref<1x7x8x128xf32, #tpu.memory_space<vmem>>, vector<1x1x8x128xf32>
    %26 = vector.shape_cast %25 : vector<1x1x8x128xf32> to vector<8x128xf32>
    %27 = arith.mulf %26, %17 : vector<8x128xf32>
    %28 = arith.addf %27, %3 : vector<8x128xf32>
    %c0_33 = arith.constant 0 : index
    %c1_34 = arith.constant 1 : index
    %c0_35 = arith.constant 0 : index
    %c0_36 = arith.constant 0 : index
    %29 = vector.load %arg5[%c0_33, %c1_34, %c0_35, %c0_36] : memref<1x7x8x128xf32, #tpu.memory_space<vmem>>, vector<1x1x8x128xf32>
    %30 = vector.shape_cast %29 : vector<1x1x8x128xf32> to vector<8x128xf32>
    %31 = vector.shape_cast %28 : vector<8x128xf32> to vector<1x1x8x128xf32>
    tpu.vector_store %arg5[%c0_33, %c1_34, %c0_35, %c0_36], %31 {strides = array<i32>} : memref<1x7x8x128xf32, #tpu.memory_space<vmem>>, vector<1x1x8x128xf32>,
    %c0_37 = arith.constant 0 : index
    %c2_38 = arith.constant 2 : index
    %c0_39 = arith.constant 0 : index
    %c0_40 = arith.constant 0 : index
    %32 = vector.load %arg2[%c0_37, %c2_38, %c0_39, %c0_40] : memref<1x7x8x128xf32, #tpu.memory_space<vmem>>, vector<1x1x8x128xf32>
    %33 = vector.shape_cast %32 : vector<1x1x8x128xf32> to vector<8x128xf32>
    %34 = arith.mulf %33, %11 : vector<8x128xf32>
    %35 = arith.addf %34, %5 : vector<8x128xf32>
    %c0_41 = arith.constant 0 : index
    %c2_42 = arith.constant 2 : index
    %c0_43 = arith.constant 0 : index
    %c0_44 = arith.constant 0 : index
    %36 = vector.load %arg5[%c0_41, %c2_42, %c0_43, %c0_44] : memref<1x7x8x128xf32, #tpu.memory_space<vmem>>, vector<1x1x8x128xf32>
    %37 = vector.shape_cast %36 : vector<1x1x8x128xf32> to vector<8x128xf32>
    %38 = vector.shape_cast %35 : vector<8x128xf32> to vector<1x1x8x128xf32>
    tpu.vector_store %arg5[%c0_41, %c2_42, %c0_43, %c0_44], %38 {strides = array<i32>} : memref<1x7x8x128xf32, #tpu.memory_space<vmem>>, vector<1x1x8x128xf32>,
    %c0_45 = arith.constant 0 : index
    %c3_46 = arith.constant 3 : index
    %c0_47 = arith.constant 0 : index
    %c0_48 = arith.constant 0 : index
    %39 = vector.load %arg2[%c0_45, %c3_46, %c0_47, %c0_48] : memref<1x7x8x128xf32, #tpu.memory_space<vmem>>, vector<1x1x8x128xf32>
    %40 = vector.shape_cast %39 : vector<1x1x8x128xf32> to vector<8x128xf32>
    %41 = math.exp %40 : vector<8x128xf32>
    %42 = arith.mulf %41, %7 : vector<8x128xf32>
    %c0_49 = arith.constant 0 : index
    %c3_50 = arith.constant 3 : index
    %c0_51 = arith.constant 0 : index
    %c0_52 = arith.constant 0 : index
    %43 = vector.load %arg5[%c0_49, %c3_50, %c0_51, %c0_52] : memref<1x7x8x128xf32, #tpu.memory_space<vmem>>, vector<1x1x8x128xf32>
    %44 = vector.shape_cast %43 : vector<1x1x8x128xf32> to vector<8x128xf32>
    %45 = vector.shape_cast %42 : vector<8x128xf32> to vector<1x1x8x128xf32>
    tpu.vector_store %arg5[%c0_49, %c3_50, %c0_51, %c0_52], %45 {strides = array<i32>} : memref<1x7x8x128xf32, #tpu.memory_space<vmem>>, vector<1x1x8x128xf32>,
    %c0_53 = arith.constant 0 : index
    %c4_54 = arith.constant 4 : index
    %c0_55 = arith.constant 0 : index
    %c0_56 = arith.constant 0 : index
    %46 = vector.load %arg2[%c0_53, %c4_54, %c0_55, %c0_56] : memref<1x7x8x128xf32, #tpu.memory_space<vmem>>, vector<1x1x8x128xf32>
    %47 = vector.shape_cast %46 : vector<1x1x8x128xf32> to vector<8x128xf32>
    %48 = math.exp %47 : vector<8x128xf32>
    %49 = arith.mulf %48, %9 : vector<8x128xf32>
    %c0_57 = arith.constant 0 : index
    %c4_58 = arith.constant 4 : index
    %c0_59 = arith.constant 0 : index
    %c0_60 = arith.constant 0 : index
    %50 = vector.load %arg5[%c0_57, %c4_58, %c0_59, %c0_60] : memref<1x7x8x128xf32, #tpu.memory_space<vmem>>, vector<1x1x8x128xf32>
    %51 = vector.shape_cast %50 : vector<1x1x8x128xf32> to vector<8x128xf32>
    %52 = vector.shape_cast %49 : vector<8x128xf32> to vector<1x1x8x128xf32>
    tpu.vector_store %arg5[%c0_57, %c4_58, %c0_59, %c0_60], %52 {strides = array<i32>} : memref<1x7x8x128xf32, #tpu.memory_space<vmem>>, vector<1x1x8x128xf32>,
    %c0_61 = arith.constant 0 : index
    %c5_62 = arith.constant 5 : index
    %c0_63 = arith.constant 0 : index
    %c0_64 = arith.constant 0 : index
    %53 = vector.load %arg2[%c0_61, %c5_62, %c0_63, %c0_64] : memref<1x7x8x128xf32, #tpu.memory_space<vmem>>, vector<1x1x8x128xf32>
    %54 = vector.shape_cast %53 : vector<1x1x8x128xf32> to vector<8x128xf32>
    %55 = math.exp %54 : vector<8x128xf32>
    %56 = arith.mulf %55, %11 : vector<8x128xf32>
    %c0_65 = arith.constant 0 : index
    %c5_66 = arith.constant 5 : index
    %c0_67 = arith.constant 0 : index
    %c0_68 = arith.constant 0 : index
    %57 = vector.load %arg5[%c0_65, %c5_66, %c0_67, %c0_68] : memref<1x7x8x128xf32, #tpu.memory_space<vmem>>, vector<1x1x8x128xf32>
    %58 = vector.shape_cast %57 : vector<1x1x8x128xf32> to vector<8x128xf32>
    %59 = vector.shape_cast %56 : vector<8x128xf32> to vector<1x1x8x128xf32>
    tpu.vector_store %arg5[%c0_65, %c5_66, %c0_67, %c0_68], %59 {strides = array<i32>} : memref<1x7x8x128xf32, #tpu.memory_space<vmem>>, vector<1x1x8x128xf32>,
    %c0_69 = arith.constant 0 : index
    %c6_70 = arith.constant 6 : index
    %c0_71 = arith.constant 0 : index
    %c0_72 = arith.constant 0 : index
    %60 = vector.load %arg2[%c0_69, %c6_70, %c0_71, %c0_72] : memref<1x7x8x128xf32, #tpu.memory_space<vmem>>, vector<1x1x8x128xf32>
    %61 = vector.shape_cast %60 : vector<1x1x8x128xf32> to vector<8x128xf32>
    %62 = arith.addf %61, %13 : vector<8x128xf32>
    %c0_73 = arith.constant 0 : index
    %c0_74 = arith.constant 0 : index
    %c0_75 = arith.constant 0 : index
    %c0_76 = arith.constant 0 : index
    %63 = vector.load %arg4[%c0_73, %c0_74, %c0_75, %c0_76] : memref<1x1x8x128xf32, #tpu.memory_space<vmem>>, vector<1x1x8x128xf32>
    %64 = vector.shape_cast %63 : vector<1x1x8x128xf32> to vector<8x128xf32>
    %cst = arith.constant 0.000000e+00 : f32
    %65 = vector.broadcast %cst : f32 to vector<8x128xf32>
    %66 = arith.cmpf ogt, %64, %65 : vector<8x128xf32>
    %67 = arith.extui %66 : vector<8x128xi1> to vector<8x128xi32>
    %68 = arith.sitofp %67 : vector<8x128xi32> to vector<8x128xf32>
    %cst_77 = arith.constant 7.853900e-01 : f32
    %69 = vector.broadcast %cst_77 : f32 to vector<8x128xf32>
    %70 = arith.subf %62, %69 : vector<8x128xf32>
    %cst_78 = arith.constant 3.14159274 : f32
    %71 = vector.broadcast %cst_78 : f32 to vector<8x128xf32>
    %72 = arith.divf %70, %71 : vector<8x128xf32>
    %cst_79 = arith.constant 0.000000e+00 : f32
    %73 = vector.broadcast %cst_79 : f32 to vector<8x128xf32>
    %74 = arith.addf %72, %73 : vector<8x128xf32>
    %75 = math.floor %74 : vector<8x128xf32>
    %cst_80 = arith.constant 3.14159274 : f32
    %76 = vector.broadcast %cst_80 : f32 to vector<8x128xf32>
    %77 = arith.mulf %75, %76 : vector<8x128xf32>
    %78 = arith.subf %70, %77 : vector<8x128xf32>
    %cst_81 = arith.constant 7.853900e-01 : f32
    %79 = vector.broadcast %cst_81 : f32 to vector<8x128xf32>
    %80 = arith.addf %78, %79 : vector<8x128xf32>
    %cst_82 = arith.constant 3.14159274 : f32
    %81 = vector.broadcast %cst_82 : f32 to vector<8x128xf32>
    %82 = arith.mulf %81, %68 : vector<8x128xf32>
    %83 = arith.addf %80, %82 : vector<8x128xf32>
    %c0_83 = arith.constant 0 : index
    %c6_84 = arith.constant 6 : index
    %c0_85 = arith.constant 0 : index
    %c0_86 = arith.constant 0 : index
    %84 = vector.load %arg5[%c0_83, %c6_84, %c0_85, %c0_86] : memref<1x7x8x128xf32, #tpu.memory_space<vmem>>, vector<1x1x8x128xf32>
    %85 = vector.shape_cast %84 : vector<1x1x8x128xf32> to vector<8x128xf32>
    %86 = vector.shape_cast %83 : vector<8x128xf32> to vector<1x1x8x128xf32>
    tpu.vector_store %arg5[%c0_83, %c6_84, %c0_85, %c0_86], %86 {strides = array<i32>} : memref<1x7x8x128xf32, #tpu.memory_space<vmem>>, vector<1x1x8x128xf32>,
    return
  }
  func.func @transform_0(%arg0: i32, %arg1: i32) -> (i32, i32, i32, i32) {
    %c0_i32 = arith.constant 0 : i32
    %c0_i32_0 = arith.constant 0 : i32
    %c0_i32_1 = arith.constant 0 : i32
    return %arg1, %c0_i32, %arg0, %c0_i32_0 : i32, i32, i32, i32
  }
  func.func @transform_1(%arg0: i32, %arg1: i32) -> (i32, i32, i32, i32) {
    %c0_i32 = arith.constant 0 : i32
    %c0_i32_0 = arith.constant 0 : i32
    %c0_i32_1 = arith.constant 0 : i32
    %c0_i32_2 = arith.constant 0 : i32
    return %c0_i32, %c0_i32_0, %arg0, %c0_i32_1 : i32, i32, i32, i32
  }
  func.func @transform_2(%arg0: i32, %arg1: i32) -> (i32, i32, i32, i32) {
    %c0_i32 = arith.constant 0 : i32
    %c0_i32_0 = arith.constant 0 : i32
    %c0_i32_1 = arith.constant 0 : i32
    return %arg1, %c0_i32, %arg0, %c0_i32_0 : i32, i32, i32, i32
  }
  func.func @transform_3(%arg0: i32, %arg1: i32) -> (i32, i32, i32, i32) {
    %c0_i32 = arith.constant 0 : i32
    %c0_i32_0 = arith.constant 0 : i32
    %c0_i32_1 = arith.constant 0 : i32
    return %arg1, %c0_i32, %arg0, %c0_i32_0 : i32, i32, i32, i32
  }
}

</mosaic_0001>

<llo_original>
// kernel: tpu_custom_call.1
$region0: #{tpu_custom_call.1}
  #allocation0 [shape = 'u32[]', space=smem, size = 0x4, offset = 0x4, fixed_abs, tag = 'smem constant byte address 0x4 - core index']
  #allocation1 [shape = 'u32[144,128]{1,0:T(1,128)}', space=vmem, size = 0x12000, scoped, tag = 'internal scratch']
  %s0 = inlined_call_operand.hbm [shape: f32[2,7,8,128], index: 0, kind: input, shape index: {}]
  %s1 = inlined_call_operand.hbm [shape: f32[1,7,8,128], index: 1, kind: input, shape index: {}]
  %s2 = inlined_call_operand.hbm [shape: f32[2,1,8,128], index: 2, kind: input, shape index: {}]
  %s3 = inlined_call_operand.hbm [shape: f32[2,7,8,128], index: 3, kind: output, shape index: {}]
  %s4 = sld [smem:[#allocation0]]
  $region57: #{tpu_custom_call.1} parent=0
    _
  %s6 = ssub.s32 1, %s4
  %s7 = scalar_select 0, %s6, %s4
  $region1: #{tpu_custom_call.1} parent=0
    #allocation2 [shape = 'u8[57344]{0}', space=vmem, size = 0xe000, scoped, tag = 'input window, operand 0']
    #allocation3 [shape = 's32[2]{0}', space=sflag, size = 0x8, scoped, tag = 'scoped memory for tpu_custom_call.1']
    #allocation4 [shape = 's32[2]{0}', space=sflag, size = 0x8, scoped, tag = 'scoped memory for tpu_custom_call.1']
    #allocation5 [shape = 'u8[28672]{0}', space=vmem, size = 0x7000, scoped, tag = 'input window, operand 1, single buffered']
    #allocation6 [shape = 's32[1]{0}', space=sflag, size = 0x4, scoped, tag = 'scoped memory for tpu_custom_call.1']
    #allocation7 [shape = 'u8[8192]{0}', space=vmem, size = 0x2000, scoped, tag = 'input window, operand 2']
    #allocation8 [shape = 'u8[57344]{0}', space=vmem, size = 0xe000, scoped, tag = 'output window, operand 0']
    %8 = vsyncpa [#allocation3], 0
    %s9 = scalar_lea.sflag [#allocation3], 1
    %10 = vsyncpa %s9, 0
    %11 = vsyncpa [#allocation6], 0
    %12 = vsyncpa [#allocation4], 0
    %s13 = scalar_lea.sflag [#allocation4], 1
    %14 = vsyncpa %s13, 0
    loop: start=0, step=1, limit=4
    $region2: #{tpu_custom_call.1} parent=1 // loop_pre_header
      _
    $region3: #{tpu_custom_call.1} parent=1 // loop_header
      %s16 = sphi 0, %s20
      %p17 = scmp.ge.s32.totalorder %s16, 4
      %s23 = sphi 0, %s35
      %s24 = sphi 0, %s31
      %s25 = sphi 0, %s23
      %s26 = sphi 0, %s24
      %s27 = sphi 0, %s25
      %s28 = sphi 0, %s26
      %s40 = sphi 0, %s42
      %s43 = sphi 0, %s40
      %s44 = sphi 0, %s43
      %s60 = sphi 0, %s44
      %s66 = sphi 0, %s68
      %s69 = sphi 0, %s66
      %s70 = sphi 0, %s69
      %s86 = sphi 0, %s70
      %s94 = sphi 0, %s96
      %s97 = sphi 0, %s94
      %s98 = sphi 0, %s97
      %s114 = sphi 0, %s98
      %s122 = sphi 0, %s124
      %s125 = sphi 0, %s122
      %s126 = sphi 0, %s125
      %s142 = sphi 0, %s126
    $region4: #{tpu_custom_call.1} parent=1 // loop_header_branch
      %19 = sbr.rel (%p17) target = $region8
    $region5: #{tpu_custom_call.1} parent=1 // loop_body
      %s21 = ssub.s32 %s16, 1
      %s22 = ssub.s32 %s16, 2
      %s29 = sadd.s32 1, %s24
      %p30 = scmp.ge.s32.totalorder %s29, 2
      %s31 = scalar_select %p30, 0, %s29
      %s32 = sadd.s32 1, %s23
      %s33 = scalar_select %p30, %s32, %s23
      %p34 = scmp.ge.s32.totalorder %s33, 1
      %s35 = scalar_select %p34, 0, %s33
      %s36 = ssub.s32 %s24, %s31
      %s37 = ssub.s32 %s23, %s35
      %s38 = sor.u32 %s36, %s37
      %p39 = scmp.eq.s32.totalorder %s38, 0
      %s41 = sadd.s32 %s40, 1
      %s42 = scalar_select %p39, %s40, %s41
      %p45 = pneg %p39
      %p46 = scmp.eq.s32.totalorder %s16, 1
      %p47 = por %p45, %p46
      %p48 = scmp.ne.s32.totalorder %s40, %s43
      %p49 = scmp.eq.s32.totalorder %s16, 0
      %p50 = por %p48, %p49
      %p51 = scmp.ne.s32.totalorder %s40, %s43
      %p52 = scmp.eq.s32.totalorder %s21, 1
      %p53 = por %p51, %p52
      %p54 = scmp.ne.s32.totalorder %s43, %s44
      %p55 = scmp.eq.s32.totalorder %s21, 0
      %p56 = por %p54, %p55
      %p57 = scmp.ne.s32.totalorder %s43, %s44
      %p58 = scmp.eq.s32.totalorder %s22, 1
      %p59 = por %p57, %p58
      %p61 = scmp.ne.s32.totalorder %s44, %s60
      %p62 = scmp.eq.s32.totalorder %s22, 0
      %p63 = por %p61, %p62
      %s64 = ssub.s32 %s23, %s35
      %p65 = scmp.eq.s32.totalorder %s64, 0
      %s67 = sadd.s32 %s66, 1
      %s68 = scalar_select %p65, %s66, %s67
      %p71 = pneg %p65
      %p72 = scmp.eq.s32.totalorder %s16, 1
      %p73 = por %p71, %p72
      %p74 = scmp.ne.s32.totalorder %s66, %s69
      %p75 = scmp.eq.s32.totalorder %s16, 0
      %p76 = por %p74, %p75
      %p77 = scmp.ne.s32.totalorder %s66, %s69
      %p78 = scmp.eq.s32.totalorder %s21, 1
      %p79 = por %p77, %p78
      %p80 = scmp.ne.s32.totalorder %s69, %s70
      %p81 = scmp.eq.s32.totalorder %s21, 0
      %p82 = por %p80, %p81
      %p83 = scmp.ne.s32.totalorder %s69, %s70
      %p84 = scmp.eq.s32.totalorder %s22, 1
      %p85 = por %p83, %p84
      %p87 = scmp.ne.s32.totalorder %s70, %s86
      %p88 = scmp.eq.s32.totalorder %s22, 0
      %p89 = por %p87, %p88
      %s90 = ssub.s32 %s24, %s31
      %s91 = ssub.s32 %s23, %s35
      %s92 = sor.u32 %s90, %s91
      %p93 = scmp.eq.s32.totalorder %s92, 0
      %s95 = sadd.s32 %s94, 1
      %s96 = scalar_select %p93, %s94, %s95
      %p99 = pneg %p93
      %p100 = scmp.eq.s32.totalorder %s16, 1
      %p101 = por %p99, %p100
      %p102 = scmp.ne.s32.totalorder %s94, %s97
      %p103 = scmp.eq.s32.totalorder %s16, 0
      %p104 = por %p102, %p103
      %p105 = scmp.ne.s32.totalorder %s94, %s97
      %p106 = scmp.eq.s32.totalorder %s21, 1
      %p107 = por %p105, %p106
      %p108 = scmp.ne.s32.totalorder %s97, %s98
      %p109 = scmp.eq.s32.totalorder %s21, 0
      %p110 = por %p108, %p109
      %p111 = scmp.ne.s32.totalorder %s97, %s98
      %p112 = scmp.eq.s32.totalorder %s22, 1
      %p113 = por %p111, %p112
      %p115 = scmp.ne.s32.totalorder %s98, %s114
      %p116 = scmp.eq.s32.totalorder %s22, 0
      %p117 = por %p115, %p116
      %s118 = ssub.s32 %s24, %s31
      %s119 = ssub.s32 %s23, %s35
      %s120 = sor.u32 %s118, %s119
      %p121 = scmp.eq.s32.totalorder %s120, 0
      %s123 = sadd.s32 %s122, 1
      %s124 = scalar_select %p121, %s122, %s123
      %p127 = pneg %p121
      %p128 = scmp.eq.s32.totalorder %s16, 1
      %p129 = por %p127, %p128
      %p130 = scmp.ne.s32.totalorder %s122, %s125
      %p131 = scmp.eq.s32.totalorder %s16, 0
      %p132 = por %p130, %p131
      %p133 = scmp.ne.s32.totalorder %s122, %s125
      %p134 = scmp.eq.s32.totalorder %s21, 1
      %p135 = por %p133, %p134
      %p136 = scmp.ne.s32.totalorder %s125, %s126
      %p137 = scmp.eq.s32.totalorder %s21, 0
      %p138 = por %p136, %p137
      %p139 = scmp.ne.s32.totalorder %s125, %s126
      %p140 = scmp.eq.s32.totalorder %s22, 1
      %p141 = por %p139, %p140
      %p143 = scmp.ne.s32.totalorder %s126, %s142
      %p144 = scmp.eq.s32.totalorder %s22, 0
      %p145 = por %p143, %p144
      %p146 = scmp.le.s32.totalorder 1, %s16
      %p147 = scmp.lt.s32.totalorder %s16, 3
      %p148 = pnand %p146, %p147
      %p149 = pneg %p148
      // Predicated region
      $region9: #{tpu_custom_call.1} parent=5 // pred_check
        _
      $region10: #{tpu_custom_call.1} parent=5 // pred_check_branch
        %151 = sbr.rel (%p148) target = $region12
      $region11: #{tpu_custom_call.1} parent=5 // pred_region
        %s152 = ssub.s32 %s16, 1
        // Predicated region
        $region13: #{tpu_custom_call.1} parent=11 // pred_check
          %p153 = pneg %p82
        $region14: #{tpu_custom_call.1} parent=11 // pred_check_branch
          %155 = sbr.rel (%p153) target = $region16
        $region15: #{tpu_custom_call.1} parent=11 // pred_region
          %s157 = ssub.s32 896, 896
          %158 = vsyncadd [#allocation6], %s157
          %s159 = smul.addr %s25, 128
          %s160 = scalar_lea.hbm %s1, %s159
          %s161 = sshll.u32 [#allocation5], 4
          %s162 = int_to_ptr.vmem [resolvable:$true] %s161
          %167 = dma.hbm_to_vmem [thread:$0]  %s160, 896, %s162, [#allocation6], 128, 128, 8
        $region16: #{tpu_custom_call.1} parent=11 // pred_fallthru
          _
      $region12: #{tpu_custom_call.1} parent=5 // pred_fallthru
        _
      %p168 = scmp.lt.s32.totalorder %s16, 2
      // Predicated region
      $region17: #{tpu_custom_call.1} parent=5 // pred_check
        %p169 = pneg %p168
      $region18: #{tpu_custom_call.1} parent=5 // pred_check_branch
        %171 = sbr.rel (%p169) target = $region20
      $region19: #{tpu_custom_call.1} parent=5 // pred_region
        // Predicated region
        $region21: #{tpu_custom_call.1} parent=19 // pred_check
          %p172 = pneg %p50
        $region22: #{tpu_custom_call.1} parent=19 // pred_check_branch
          %174 = sbr.rel (%p172) target = $region24
        $region23: #{tpu_custom_call.1} parent=19 // pred_region
          %s175 = sand.u32 %s16, 1
          %s176 = scalar_lea.sflag [#allocation3], %s175
          %s177 = sand.u32 %s40, 1
          %s178 = smul.addr %s177, 56
          %s179 = scalar_lea.vmem [#allocation2], %s178
          %s181 = ssub.s32 896, 896
          %182 = vsyncadd %s176, %s181
          %s183 = smul.addr %s24, 7
          %s184 = sadd.s32 %s23, %s183
          %s185 = smul.addr %s184, 128
          %s186 = scalar_lea.hbm %s0, %s185
          %s187 = sshll.u32 %s179, 4
          %s188 = int_to_ptr.vmem [resolvable:$true] %s187
          %193 = dma.hbm_to_vmem [thread:$0]  %s186, 896, %s188, %s176, 128, 128, 8
        $region24: #{tpu_custom_call.1} parent=19 // pred_fallthru
          _
        // Predicated region
        $region25: #{tpu_custom_call.1} parent=19 // pred_check
          %p194 = pneg %p104
        $region26: #{tpu_custom_call.1} parent=19 // pred_check_branch
          %196 = sbr.rel (%p194) target = $region28
        $region27: #{tpu_custom_call.1} parent=19 // pred_region
          %s197 = sand.u32 %s16, 1
          %s198 = scalar_lea.sflag [#allocation3], %s197
          %s199 = sand.u32 %s94, 1
          %s200 = smul.addr %s199, 8
          %s201 = scalar_lea.vmem [#allocation7], %s200
          %s203 = ssub.s32 128, 128
          %204 = vsyncadd %s198, %s203
          %s205 = sadd.s32 %s23, %s24
          %s206 = smul.addr %s205, 128
          %s207 = scalar_lea.hbm %s2, %s206
          %s209 = sshll.u32 %s201, 4
          %s210 = int_to_ptr.vmem [resolvable:$true] %s209
          %212 = dma.hbm_to_vmem [thread:$0]  %s207, 128, %s210, %s198
        $region28: #{tpu_custom_call.1} parent=19 // pred_fallthru
          _
      $region20: #{tpu_custom_call.1} parent=5 // pred_fallthru
        _
      %p213 = scmp.le.s32.totalorder 1, %s16
      %p214 = scmp.lt.s32.totalorder %s16, 3
      %p215 = pnand %p213, %p214
      %p216 = pneg %p215
      // Predicated region
      $region29: #{tpu_custom_call.1} parent=5 // pred_check
        _
      $region30: #{tpu_custom_call.1} parent=5 // pred_check_branch
        %218 = sbr.rel (%p215) target = $region32
      $region31: #{tpu_custom_call.1} parent=5 // pred_region
        %s219 = ssub.s32 %s16, 1
        %s220 = sand.u32 %s21, 1
        %s221 = scalar_lea.sflag [#allocation3], %s220
        %s222 = sand.u32 %s43, 1
        %s223 = smul.addr %s222, 56
        %s224 = scalar_lea.vmem [#allocation2], %s223
        // Predicated region
        $region33: #{tpu_custom_call.1} parent=31 // pred_check
          %p225 = pneg %p56
        $region34: #{tpu_custom_call.1} parent=31 // pred_check_branch
          %227 = sbr.rel (%p225) target = $region36
        $region35: #{tpu_custom_call.1} parent=31 // pred_region
          %228 = dma.done %s221, 896
        $region36: #{tpu_custom_call.1} parent=31 // pred_fallthru
          _
        // Predicated region
        $region37: #{tpu_custom_call.1} parent=31 // pred_check
          %p229 = pneg %p82
        $region38: #{tpu_custom_call.1} parent=31 // pred_check_branch
          %231 = sbr.rel (%p229) target = $region40
        $region39: #{tpu_custom_call.1} parent=31 // pred_region
          %232 = dma.done [#allocation6], 896
        $region40: #{tpu_custom_call.1} parent=31 // pred_fallthru
          _
        %s233 = sand.u32 %s21, 1
        %s234 = scalar_lea.sflag [#allocation3], %s233
        %s235 = sand.u32 %s97, 1
        %s236 = smul.addr %s235, 8
        %s237 = scalar_lea.vmem [#allocation7], %s236
        // Predicated region
        $region41: #{tpu_custom_call.1} parent=31 // pred_check
          %p238 = pneg %p110
        $region42: #{tpu_custom_call.1} parent=31 // pred_check_branch
          %240 = sbr.rel (%p238) target = $region44
        $region43: #{tpu_custom_call.1} parent=31 // pred_region
          %241 = dma.done %s234, 128
        $region44: #{tpu_custom_call.1} parent=31 // pred_fallthru
          _
        %s242 = sand.u32 %s21, 1
        %s243 = scalar_lea.sflag [#allocation3], %s242
        %s244 = sand.u32 %s43, 1
        %s245 = smul.addr %s244, 56
        %s246 = scalar_lea.vmem [#allocation2], %s245
        %p247 = pneg %p56
        %p248 = pneg %p53
        %p249 = pneg %p82
        %p250 = pneg %p79
        %s251 = sand.u32 %s21, 1
        %s252 = scalar_lea.sflag [#allocation3], %s251
        %s253 = sand.u32 %s97, 1
        %s254 = smul.addr %s253, 8
        %s255 = scalar_lea.vmem [#allocation7], %s254
        %p256 = pneg %p110
        %p257 = pneg %p107
        %p258 = pneg %p138
        %p259 = pneg %p135
        %s260 = sand.u32 %s125, 1
        %s261 = scalar_lea.sflag [#allocation4], %s260
        %s262 = sand.u32 %s125, 1
        %s263 = smul.addr %s262, 56
        %s264 = scalar_lea.vmem [#allocation8], %s263
        %v265 = vld [vmem:[#allocation5] sm:$0xff]
        %s266 = scalar_lea.vmem [#allocation5], 8
        %v267 = vld [vmem:[%s266] sm:$0xff]
        %s268 = scalar_lea.vmem [#allocation5], 16
        %v269 = vld [vmem:[%s268] sm:$0xff]
        %s270 = scalar_lea.vmem [#allocation5], 24
        %v271 = vld [vmem:[%s270] sm:$0xff]
        %s272 = scalar_lea.vmem [#allocation5], 32
        %v273 = vld [vmem:[%s272] sm:$0xff]
        %s274 = scalar_lea.vmem [#allocation5], 40
        %v275 = vld [vmem:[%s274] sm:$0xff]
        %s276 = scalar_lea.vmem [#allocation5], 48
        %v277 = vld [vmem:[%s276] sm:$0xff]
        %v278 = vmul.f32 %v271, %v271
        %v279 = vmul.f32 %v273, %v273
        %v280 = vadd.f32 %v278, %v279
        %v281 = vrsqrt.pop %v280
        %v282 = vmul.f32 %v280, %v281
        %vm283 = vcmp.eq.f32.partialorder %v280, inf
        %v284 = vsel %vm283, %v280, %v282
        %vm285 = vcmp.eq.f32.partialorder %v280, 0.0
        %v286 = vand.u32 %v280, 2147483648
        %v287 = vsel %vm285, %v286, %v284
        %v288 = vld [vmem:[%s224] sm:$0xff]
        %v289 = vmul.f32 %v288, %v287
        %v290 = vadd.f32 %v289, %v265
        %291 = vst [vmem:[%s264] sm:$0xff] %v290
        %s292 = scalar_lea.vmem %s224, 8 [#allocation2]
        %v293 = vld [vmem:[%s292] sm:$0xff]
        %v294 = vmul.f32 %v293, %v287
        %v295 = vadd.f32 %v294, %v267
        %s296 = scalar_lea.vmem %s264, 8 [#allocation8]
        %297 = vst [vmem:[%s296] sm:$0xff] %v295
        %s298 = scalar_lea.vmem %s224, 16 [#allocation2]
        %v299 = vld [vmem:[%s298] sm:$0xff]
        %v300 = vmul.f32 %v299, %v275
        %v301 = vadd.f32 %v300, %v269
        %s302 = scalar_lea.vmem %s264, 16 [#allocation8]
        %303 = vst [vmem:[%s302] sm:$0xff] %v301
        %s304 = scalar_lea.vmem %s224, 24 [#allocation2]
        %v305 = vld [vmem:[%s304] sm:$0xff]
        %v306 = vmul.f32 %v305, 1.442695
        %v307 = vpow.pop %v306
        %v308 = vmul.f32 %v307, %v271
        %s309 = scalar_lea.vmem %s264, 24 [#allocation8]
        %310 = vst [vmem:[%s309] sm:$0xff] %v308
        %s311 = scalar_lea.vmem %s224, 32 [#allocation2]
        %v312 = vld [vmem:[%s311] sm:$0xff]
        %v313 = vmul.f32 %v312, 1.442695
        %v314 = vpow.pop %v313
        %v315 = vmul.f32 %v314, %v273
        %s316 = scalar_lea.vmem %s264, 32 [#allocation8]
        %317 = vst [vmem:[%s316] sm:$0xff] %v315
        %s318 = scalar_lea.vmem %s224, 40 [#allocation2]
        %v319 = vld [vmem:[%s318] sm:$0xff]
        %v320 = vmul.f32 %v319, 1.442695
        %v321 = vpow.pop %v320
        %v322 = vmul.f32 %v321, %v275
        %s323 = scalar_lea.vmem %s264, 40 [#allocation8]
        %324 = vst [vmem:[%s323] sm:$0xff] %v322
        %s325 = scalar_lea.vmem %s224, 48 [#allocation2]
        %v326 = vld [vmem:[%s325] sm:$0xff]
        %v327 = vadd.f32 %v326, %v277
        %v328 = vld [vmem:[%s237] sm:$0xff]
        %vm329 = vcmp.gt.f32.partialorder %v328, 0.0
        %v330 = vsel %vm329, 1, 0
        %v331 = vcvt.s32.f32 %v330
        %v332 = vsub.f32 %v327, 0.78539
        %v333 = vrcp.pop 3.1415927
        %v334 = vmul.f32 %v332, %v333
        %v335 = vadd.f32 %v334, 0.0
        %v336 = vfloor.f32 %v335
        %v337 = vmul.f32 %v336, 3.1415927
        %v338 = vsub.f32 %v332, %v337
        %v339 = vadd.f32 %v338, 0.78539
        %v340 = vmul.f32 %v331, 3.1415927
        %v341 = vadd.f32 %v339, %v340
        %s342 = scalar_lea.vmem %s264, 48 [#allocation8]
        %343 = vst [vmem:[%s342] sm:$0xff] %v341
        %s344 = sand.u32 %s125, 1
        %s345 = scalar_lea.sflag [#allocation4], %s344
        %s346 = sand.u32 %s125, 1
        %s347 = smul.addr %s346, 56
        %s348 = scalar_lea.vmem [#allocation8], %s347
        // Predicated region
        $region45: #{tpu_custom_call.1} parent=31 // pred_check
          %p349 = pneg %p135
        $region46: #{tpu_custom_call.1} parent=31 // pred_check_branch
          %351 = sbr.rel (%p349) target = $region48
        $region47: #{tpu_custom_call.1} parent=31 // pred_region
          %s353 = ssub.s32 896, 896
          %354 = vsyncadd %s345, %s353
          %s355 = smul.addr %s26, 7
          %s356 = sadd.s32 %s25, %s355
          %s357 = smul.addr %s356, 128
          %s358 = scalar_lea.hbm %s3, %s357
          %s359 = sshll.u32 %s348, 4
          %s360 = int_to_ptr.vmem [resolvable:$true] %s359
          %365 = dma.vmem_to_hbm [thread:$0]  %s360, 896, %s358, %s345, 128, 128, 8
        $region48: #{tpu_custom_call.1} parent=31 // pred_fallthru
          _
      $region32: #{tpu_custom_call.1} parent=5 // pred_fallthru
        _
      %p366 = scmp.le.s32.totalorder 2, %s16
      // Predicated region
      $region49: #{tpu_custom_call.1} parent=5 // pred_check
        %p367 = pneg %p366
      $region50: #{tpu_custom_call.1} parent=5 // pred_check_branch
        %369 = sbr.rel (%p367) target = $region52
      $region51: #{tpu_custom_call.1} parent=5 // pred_region
        %s370 = ssub.s32 %s16, 2
        // Predicated region
        $region53: #{tpu_custom_call.1} parent=51 // pred_check
          %p371 = pneg %p141
        $region54: #{tpu_custom_call.1} parent=51 // pred_check_branch
          %373 = sbr.rel (%p371) target = $region56
        $region55: #{tpu_custom_call.1} parent=51 // pred_region
          %s374 = sand.u32 %s126, 1
          %s375 = scalar_lea.sflag [#allocation4], %s374
          %s376 = sand.u32 %s126, 1
          %s377 = smul.addr %s376, 56
          %s378 = scalar_lea.vmem [#allocation8], %s377
          %379 = dma.done %s375, 896
        $region56: #{tpu_custom_call.1} parent=51 // pred_fallthru
          _
      $region52: #{tpu_custom_call.1} parent=5 // pred_fallthru
        _
    $region6: #{tpu_custom_call.1} parent=1 // loop_footer
      %s20 = sadd.s32 1, %s16
    $region7: #{tpu_custom_call.1} parent=1 // loop_footer_branch
      %15 = sbr.rel target = $region3
    $region8: #{tpu_custom_call.1} parent=1 // loop_exit
      _
    %380 = vsyncpa [#allocation3], 1
    %s381 = scalar_lea.sflag [#allocation3], 1
    %382 = vsyncpa %s381, 1
    %383 = vsyncpa [#allocation6], 1
    %384 = vsyncpa [#allocation4], 1
    %s385 = scalar_lea.sflag [#allocation4], 1
    %386 = vsyncpa %s385, 1

</llo_original>
